<compile_context>
chip_gen: v7x
topology: tpu7x:2x2x1
jax: 0.10.0
libtpu: 0.0.40
codegen_flags: <defaults>
</compile_context>

<pallas_src>
import functools

import jax
import jax.numpy as jnp
from jax.experimental import pallas as pl
from jax.experimental.pallas import tpu as pltpu


def _round_up(n, m):
    return ((n + m - 1) // m) * m


def _vmem_capacity_bytes():
    """Physical VMEM per TensorCore; conservative 64 MiB fallback."""
    try:
        info = pltpu.get_tpu_info()
        cap = getattr(info, "vmem_capacity_bytes", None)
        if cap:
            return int(cap)
    except Exception:
        pass
    return 64 * 1024 * 1024


def _select_tiles(M, d_model, d_hidden, itemsize, out_itemsize):
    """Pick (tm, tn_h, dmp, dhp, Mp, vmem_limit) from problem size + VMEM."""
    dmp = _round_up(d_model, 128)
    vmem_cap = _vmem_capacity_bytes()
    if vmem_cap <= 80 * 1024 * 1024:           # v7x-class: 64 MiB per TC
        budget = min(vmem_cap, 64 * 1024 * 1024) - 8 * 1024 * 1024
        tm_target = 512                        # ridge ~310 flops/byte
    else:                                      # v5e / v6e: 128 MiB per TC
        budget = 100 * 1024 * 1024
        tm_target = 1024                       # v6e ridge ~640 flops/byte

    # bias tiles (double-buffered) + elementwise-intermediate slack
    misc = 2 * (2 * 256 * 4 + dmp * 4) + 2 * 1024 * 1024

    tnh = 128
    tm_cap = 8
    for cand in (256, 128):
        cand = min(cand, _round_up(d_hidden, 128))
        # double-buffered fused [WG|W1] tile (dmp x 2*tnh) + W2 tile (tnh x dmp)
        weights_db = 6 * dmp * cand * itemsize
        # x (x2) + out (x2) + f32 accumulator + per-row elementwise temps
        per_row = dmp * (2 * itemsize + 2 * out_itemsize + 4) + 24 * cand
        cap = (budget - weights_db - misc) // per_row
        tnh = cand
        tm_cap = int(cap)
        if tm_cap >= 64:
            break
    tm_cap = max(8, (min(tm_cap, tm_target) // 8) * 8)

    dhp = _round_up(d_hidden, tnh)
    M8 = _round_up(M, 8)
    n_row = -(-M8 // tm_cap)
    if n_row == 1 and M8 >= 256:
        n_row = 2                              # keep both v7x TCs busy (megacore)
    tm = _round_up(-(-M8 // n_row), 8)
    Mp = tm * n_row

    per_row = dmp * (2 * itemsize + 2 * out_itemsize + 4) + 24 * tnh
    need = 6 * dmp * tnh * itemsize + per_row * tm + misc
    vmem_limit = int(max(budget, need))
    return tm, tnh, dmp, dhp, Mp, vmem_limit


def swiglu_kernel(x_ref, wgw1_ref, bgb1_ref, w2_ref, b2_ref, o_ref, acc_ref,
                  *, tnh):
    j = pl.program_id(1)

    @pl.when(j == 0)
    def _():
        acc_ref[...] = jnp.zeros_like(acc_ref)

    # Fused up-projection: one DMA stream / one MXU push for [WG_j | W1_j].
    gz = jnp.dot(x_ref[...], wgw1_ref[...],
                 preferred_element_type=jnp.float32) + bgb1_ref[...]
    g = gz[:, :tnh]                 # lane-aligned static split (tnh % 128 == 0)
    z = gz[:, tnh:]

    # silu on the EUP: exp + approximate reciprocal (no exact VALU divide).
    g = g * pl.reciprocal(1.0 + jnp.exp(-g), approx=True)

    # Partial down projection for this hidden tile, accumulated in f32.
    h = (g * z).astype(w2_ref.dtype)
    acc_ref[...] += jnp.dot(h, w2_ref[...], preferred_element_type=jnp.float32)

    @pl.when(j == pl.num_programs(1) - 1)
    def _():
        o_ref[...] = (acc_ref[...] + b2_ref[...]).astype(o_ref.dtype)


def swiglu_pallas(x, wg, bg, w1, b1, w2, b2, *, compute_dtype=jnp.bfloat16):
    """x: (B, S, d_model). Weights stored (in, out); biases (1, out)."""
    B, S, d_model = x.shape
    d_hidden = wg.shape[1]
    M = B * S

    cdt = jnp.dtype(compute_dtype)
    out_dtype = x.dtype
    itemsize = cdt.itemsize
    out_itemsize = jnp.dtype(out_dtype).itemsize

    tm, tnh, dmp, dhp, Mp, vmem_limit = _select_tiles(
        M, d_model, d_hidden, itemsize, out_itemsize)
    n_row = Mp // tm
    n_hid = dhp // tnh

    def pad2(a, rows, cols, dtype):
        a = a.astype(dtype)
        pr, pc = rows - a.shape[0], cols - a.shape[1]
        if pr or pc:
            a = jnp.pad(a, ((0, pr), (0, pc)))
        return a

    x2d = pad2(x.reshape(M, d_model), Mp, dmp, cdt)

    # Fuse WG|W1 (and bG|b1) with per-hidden-tile interleaving so block j of
    # the fused tensor is [WG_tile_j | W1_tile_j].
    wg_p = pad2(wg, dmp, dhp, cdt).reshape(dmp, n_hid, tnh)
    w1_p = pad2(w1, dmp, dhp, cdt).reshape(dmp, n_hid, tnh)
    wgw1 = jnp.stack([wg_p, w1_p], axis=2).reshape(dmp, 2 * dhp)

    bg_p = pad2(bg, 1, dhp, jnp.float32).reshape(1, n_hid, tnh)
    b1_p = pad2(b1, 1, dhp, jnp.float32).reshape(1, n_hid, tnh)
    bgb1 = jnp.stack([bg_p, b1_p], axis=2).reshape(1, 2 * dhp)

    w2_p = pad2(w2, dhp, dmp, cdt)
    b2_p = pad2(b2, 1, dmp, jnp.float32)

    grid = (n_row, n_hid)                       # reduction (hidden) axis last

    # Weights are re-streamed once per row tile; x / out move once.
    bytes_accessed = (
        x2d.size * itemsize
        + n_row * (wgw1.size + w2_p.size) * itemsize
        + n_row * (bgb1.size + b2_p.size) * 4
        + Mp * dmp * out_itemsize
    )
    cost = pl.CostEstimate(
        flops=6 * Mp * dmp * dhp,               # fused up-proj + down-proj
        transcendentals=2 * Mp * dhp,           # exp + approx reciprocal
        bytes_accessed=int(bytes_accessed),
    )

    out2d = pl.pallas_call(
        functools.partial(swiglu_kernel, tnh=tnh),
        out_shape=jax.ShapeDtypeStruct((Mp, dmp), out_dtype),
        grid_spec=pltpu.PrefetchScalarGridSpec(
            num_scalar_prefetch=0,
            grid=grid,
            in_specs=[
                pl.BlockSpec((tm, dmp), lambda i, j: (i, 0)),         # x rows
                pl.BlockSpec((dmp, 2 * tnh), lambda i, j: (0, j)),    # [WG|W1] tile
                pl.BlockSpec((1, 2 * tnh), lambda i, j: (0, j)),      # [bG|b1] tile
                pl.BlockSpec((tnh, dmp), lambda i, j: (j, 0)),        # W2 tile
                pl.BlockSpec((1, dmp), lambda i, j: (0, 0)),          # b2
            ],
            out_specs=pl.BlockSpec((tm, dmp), lambda i, j: (i, 0)),
            scratch_shapes=[pltpu.VMEM((tm, dmp), jnp.float32)],      # f32 acc
        ),
        compiler_params=pltpu.CompilerParams(
            dimension_semantics=("parallel", "arbitrary"),
            vmem_limit_bytes=vmem_limit,
        ),
        cost_estimate=cost,
    )(x2d, wgw1, bgb1, w2_p, b2_p)

    return out2d[:M, :d_model].reshape(B, S, d_model)


def swiglu_ref(x, wg, bg, w1, b1, w2, b2):
    g = x @ wg + bg
    g = g * jax.nn.sigmoid(g)
    z = x @ w1 + b1
    return (g * z) @ w2 + b2


if __name__ == "__main__":
    # Small shapes consistent with the module: (batch, seq, d_model)
    batch, seq, d_model = 2, 8, 48
    swiglu_ratio = 8 / 3
    d_hidden = int(d_model * swiglu_ratio)  # 128

    key = jax.random.PRNGKey(0)
    kx, kwg, kbg, kw1, kb1, kw2, kb2 = jax.random.split(key, 7)

    # Deterministic param init (PyTorch-Linear-like uniform(+-1/sqrt(fan_in))),
    # stored as (in_features, out_features).
    def init_linear(kw, kb, fan_in, fan_out):
        bound = 1.0 / (fan_in ** 0.5)
        w = jax.random.uniform(kw, (fan_in, fan_out), jnp.float32, -bound, bound)
        b = jax.random.uniform(kb, (1, fan_out), jnp.float32, -bound, bound)
        return w, b

    wg, bg = init_linear(kwg, kbg, d_model, d_hidden)
    w1, b1 = init_linear(kw1, kb1, d_model, d_hidden)
    w2, b2 = init_linear(kw2, kb2, d_hidden, d_model)

    x = jax.random.normal(kx, (batch, seq, d_model), jnp.float32)

    ref = swiglu_ref(x.reshape(-1, d_model), wg, bg, w1, b1, w2, b2).reshape(
        batch, seq, d_model)

    # Default path: bf16 weights/activations, f32 accumulation.
    out_bf16 = jax.block_until_ready(swiglu_pallas(x, wg, bg, w1, b1, w2, b2))
    assert out_bf16.shape == (batch, seq, d_model)
    assert jnp.allclose(out_bf16, ref, atol=4e-2, rtol=4e-2), "bf16 mismatch vs reference"

    # Full f32 compute path (approx-reciprocal silu => slightly loose tolerance).
    out_f32 = jax.block_until_ready(
        swiglu_pallas(x, wg, bg, w1, b1, w2, b2, compute_dtype=jnp.float32))
    assert out_f32.shape == (batch, seq, d_model)
    assert jnp.allclose(out_f32, ref, atol=5e-3, rtol=5e-3), "f32 mismatch vs reference"

    print("KERNEL_OK")
</pallas_src>

<mosaic_0001>
module attributes {stable_mosaic.version = 11 : i64} {
  func.func @swiglu_kernel(%arg0: i32, %arg1: i32, %arg2: memref<16x128xbf16, #tpu.memory_space<vmem>>, %arg3: memref<128x256xbf16, #tpu.memory_space<vmem>>, %arg4: memref<1x256xf32, #tpu.memory_space<vmem>>, %arg5: memref<128x128xbf16, #tpu.memory_space<vmem>>, %arg6: memref<1x128xf32, #tpu.memory_space<vmem>>, %arg7: memref<16x128xf32, #tpu.memory_space<vmem>>, %arg8: memref<16x128xf32, #tpu.memory_space<vmem>>) attributes {dimension_semantics = [#tpu.dimension_semantics<parallel>, #tpu.dimension_semantics<arbitrary>], iteration_bounds = array<i64: 1, 1>, scalar_prefetch = 0 : i64, scratch_operands = 1 : i64, tpu.core_type = #tpu.core_type<tc>, window_params = [{transform_indices = @transform_0, window_bounds = array<i64: 16, 128>}, {transform_indices = @transform_1, window_bounds = array<i64: 128, 256>}, {transform_indices = @transform_2, window_bounds = array<i64: 1, 256>}, {transform_indices = @transform_3, window_bounds = array<i64: 128, 128>}, {pipeline_mode = #tpu.pipeline_mode<synchronous>, transform_indices = @transform_4, window_bounds = array<i64: 1, 128>}, {transform_indices = @transform_5, window_bounds = array<i64: 16, 128>}]} {
    %c0_i32 = arith.constant 0 : i32
    %0 = arith.cmpi eq, %arg1, %c0_i32 : i32
    %1 = arith.extui %0 : i1 to i32
    %c0_i32_0 = arith.constant 0 : i32
    %2 = arith.cmpi ne, %1, %c0_i32_0 : i32
    scf.if %2 {
      %cst_17 = arith.constant 0.000000e+00 : f32
      %28 = vector.broadcast %cst_17 : f32 to vector<16x128xf32>
      %c0_18 = arith.constant 0 : index
      %c0_19 = arith.constant 0 : index
      %29 = vector.load %arg8[%c0_18, %c0_19] : memref<16x128xf32, #tpu.memory_space<vmem>>, vector<16x128xf32>
      tpu.vector_store %arg8[%c0_18, %c0_19], %28 {strides = array<i32>} : memref<16x128xf32, #tpu.memory_space<vmem>>, vector<16x128xf32>,
    } else {
    }
    %c0 = arith.constant 0 : index
    %c0_1 = arith.constant 0 : index
    %3 = vector.load %arg2[%c0, %c0_1] : memref<16x128xbf16, #tpu.memory_space<vmem>>, vector<16x128xbf16>
    %c0_2 = arith.constant 0 : index
    %c0_3 = arith.constant 0 : index
    %4 = vector.load %arg3[%c0_2, %c0_3] : memref<128x256xbf16, #tpu.memory_space<vmem>>, vector<128x256xbf16>
    %cst = arith.constant dense<0.000000e+00> : vector<16x256xf32>
    %5 = tpu.matmul %3, %4, %cst {dimension_numbers = #tpu.dot_dimension_numbers<[1], [0], [0], [1], [0, 0, 1, 1], [], []>} : vector<16x128xbf16>, vector<128x256xbf16>, vector<16x256xf32> -> vector<16x256xf32>
    %c0_4 = arith.constant 0 : index
    %c0_5 = arith.constant 0 : index
    %6 = vector.load %arg4[%c0_4, %c0_5] : memref<1x256xf32, #tpu.memory_space<vmem>>, vector<1x256xf32>
    %7 = vector.broadcast %6 : vector<1x256xf32> to vector<16x256xf32>
    %8 = arith.addf %5, %7 : vector<16x256xf32>
    %9 = vector.extract_strided_slice %8 {offsets = [0, 0], sizes = [16, 128], strides = [1, 1]} : vector<16x256xf32> to vector<16x128xf32>
    %10 = vector.extract_strided_slice %8 {offsets = [0, 128], sizes = [16, 128], strides = [1, 1]} : vector<16x256xf32> to vector<16x128xf32>
    %cst_6 = arith.constant 0.000000e+00 : f32
    %11 = vector.broadcast %cst_6 : f32 to vector<16x128xf32>
    %12 = arith.subf %11, %9 : vector<16x128xf32>
    %13 = math.exp %12 : vector<16x128xf32>
    %cst_7 = arith.constant 1.000000e+00 : f32
    %14 = vector.broadcast %cst_7 : f32 to vector<16x128xf32>
    %15 = arith.addf %14, %13 : vector<16x128xf32>
    %16 = tpu.reciprocal %15 {approx = true} : vector<16x128xf32> -> vector<16x128xf32>
    %17 = arith.mulf %9, %16 : vector<16x128xf32>
    %18 = arith.mulf %17, %10 : vector<16x128xf32>
    %19 = arith.truncf %18 : vector<16x128xf32> to vector<16x128xbf16>
    %c0_8 = arith.constant 0 : index
    %c0_9 = arith.constant 0 : index
    %20 = vector.load %arg8[%c0_8, %c0_9] : memref<16x128xf32, #tpu.memory_space<vmem>>, vector<16x128xf32>
    %c0_10 = arith.constant 0 : index
    %c0_11 = arith.constant 0 : index
    %21 = vector.load %arg5[%c0_10, %c0_11] : memref<128x128xbf16, #tpu.memory_space<vmem>>, vector<128x128xbf16>
    %cst_12 = arith.constant dense<0.000000e+00> : vector<16x128xf32>
    %22 = tpu.matmul %19, %21, %cst_12 {dimension_numbers = #tpu.dot_dimension_numbers<[1], [0], [0], [1], [0, 0, 1, 1], [], []>} : vector<16x128xbf16>, vector<128x128xbf16>, vector<16x128xf32> -> vector<16x128xf32>
    %23 = arith.addf %20, %22 : vector<16x128xf32>
    %c0_13 = arith.constant 0 : index
    %c0_14 = arith.constant 0 : index
    %24 = vector.load %arg8[%c0_13, %c0_14] : memref<16x128xf32, #tpu.memory_space<vmem>>, vector<16x128xf32>
    tpu.vector_store %arg8[%c0_13, %c0_14], %23 {strides = array<i32>} : memref<16x128xf32, #tpu.memory_space<vmem>>, vector<16x128xf32>,
    %c0_i32_15 = arith.constant 0 : i32
    %25 = arith.cmpi eq, %arg1, %c0_i32_15 : i32
    %26 = arith.extui %25 : i1 to i32
    %c0_i32_16 = arith.constant 0 : i32
    %27 = arith.cmpi ne, %26, %c0_i32_16 : i32
    scf.if %27 {
      %c0_17 = arith.constant 0 : index
      %c0_18 = arith.constant 0 : index
      %28 = vector.load %arg8[%c0_17, %c0_18] : memref<16x128xf32, #tpu.memory_space<vmem>>, vector<16x128xf32>
      %c0_19 = arith.constant 0 : index
      %c0_20 = arith.constant 0 : index
      %29 = vector.load %arg6[%c0_19, %c0_20] : memref<1x128xf32, #tpu.memory_space<vmem>>, vector<1x128xf32>
      %30 = vector.broadcast %29 : vector<1x128xf32> to vector<16x128xf32>
      %31 = arith.addf %28, %30 : vector<16x128xf32>
      %c0_21 = arith.constant 0 : index
      %c0_22 = arith.constant 0 : index
      %32 = vector.load %arg7[%c0_21, %c0_22] : memref<16x128xf32, #tpu.memory_space<vmem>>, vector<16x128xf32>
      tpu.vector_store %arg7[%c0_21, %c0_22], %31 {strides = array<i32>} : memref<16x128xf32, #tpu.memory_space<vmem>>, vector<16x128xf32>,
    } else {
    }
    return
  }
  func.func @transform_0(%arg0: i32, %arg1: i32) -> (i32, i32) {
    %c0_i32 = arith.constant 0 : i32
    %c0_i32_0 = arith.constant 0 : i32
    return %arg0, %c0_i32 : i32, i32
  }
  func.func @transform_1(%arg0: i32, %arg1: i32) -> (i32, i32) {
    %c0_i32 = arith.constant 0 : i32
    %c0_i32_0 = arith.constant 0 : i32
    return %c0_i32, %arg1 : i32, i32
  }
  func.func @transform_2(%arg0: i32, %arg1: i32) -> (i32, i32) {
    %c0_i32 = arith.constant 0 : i32
    %c0_i32_0 = arith.constant 0 : i32
    return %c0_i32, %arg1 : i32, i32
  }
  func.func @transform_3(%arg0: i32, %arg1: i32) -> (i32, i32) {
    %c0_i32 = arith.constant 0 : i32
    %c0_i32_0 = arith.constant 0 : i32
    return %arg1, %c0_i32 : i32, i32
  }
  func.func @transform_4(%arg0: i32, %arg1: i32) -> (i32, i32) {
    %c0_i32 = arith.constant 0 : i32
    %c0_i32_0 = arith.constant 0 : i32
    %c0_i32_1 = arith.constant 0 : i32
    return %c0_i32, %c0_i32_0 : i32, i32
  }
  func.func @transform_5(%arg0: i32, %arg1: i32) -> (i32, i32) {
    %c0_i32 = arith.constant 0 : i32
    %c0_i32_0 = arith.constant 0 : i32
    return %arg0, %c0_i32 : i32, i32
  }
}

</mosaic_0001>

<llo_original>
// kernel: tpu_custom_call.1
$region0: #{tpu_custom_call.1}
  #allocation0 [shape = 'u32[]', space=smem, size = 0x4, offset = 0x4, fixed_abs, tag = 'smem constant byte address 0x4 - core index']
  #allocation1 [shape = 'u32[144,128]{1,0:T(1,128)}', space=vmem, size = 0x12000, scoped, tag = 'internal scratch']
  #allocation2 [shape = 'f32[16,128]{1,0:T(8,128)}', space=vmem, size = 0x2000, scoped, tag = 'scratch operand']
  %s0 = inlined_call_operand.hbm [shape: bf16[16,128], index: 0, kind: input, shape index: {}]
  %s1 = inlined_call_operand.hbm [shape: bf16[128,256], index: 1, kind: input, shape index: {}]
  %s2 = inlined_call_operand.vmem [shape: f32[1,256], index: 2, kind: input, shape index: {}]
  %s3 = inlined_call_operand.hbm [shape: bf16[128,128], index: 3, kind: input, shape index: {}]
  %s4 = inlined_call_operand.vmem [shape: f32[1,128], index: 4, kind: input, shape index: {}]
  %s5 = inlined_call_operand.hbm [shape: f32[16,128], index: 5, kind: output, shape index: {}]
  %s6 = sld [smem:[#allocation0]]
  $region50: #{tpu_custom_call.1} parent=0
    _
  %s8 = ssub.s32 1, %s6
  %s9 = scalar_select 0, %s8, %s6
  $region1: #{tpu_custom_call.1} parent=0
    #allocation3 [shape = 'u8[4096]{0}', space=vmem, size = 0x1000, scoped, tag = 'input window, operand 0, single buffered']
    #allocation4 [shape = 's32[1]{0}', space=sflag, size = 0x4, scoped, tag = 'scoped memory for tpu_custom_call.1']
    #allocation5 [shape = 's32[1]{0}', space=sflag, size = 0x4, scoped, tag = 'scoped memory for tpu_custom_call.1']
    #allocation6 [shape = 'u8[65536]{0}', space=vmem, size = 0x10000, scoped, tag = 'input window, operand 1, single buffered']
    #allocation7 [shape = 's32[1]{0}', space=sflag, size = 0x4, scoped, tag = 'scoped memory for tpu_custom_call.1']
    #allocation8 [shape = 'u8[32768]{0}', space=vmem, size = 0x8000, scoped, tag = 'input window, operand 3, single buffered']
    #allocation9 [shape = 'u8[8192]{0}', space=vmem, size = 0x2000, scoped, tag = 'output window, operand 0, single buffered']
    %10 = vsyncpa [#allocation4], 0
    %11 = vsyncpa [#allocation7], 0
    %12 = vsyncpa [#allocation5], 0
    // Predicated region
    $region2: #{tpu_custom_call.1} parent=1 // pred_check
      _
    $region3: #{tpu_custom_call.1} parent=1 // pred_check_branch
      %14 = sbr.rel (0) target = $region5
    $region4: #{tpu_custom_call.1} parent=1 // pred_region
      %s16 = ssub.s32 128, 128
      %17 = vsyncadd [#allocation4], %s16
      %s18 = sshll.u32 [#allocation3], 4
      %s19 = int_to_ptr.vmem [resolvable:$true] %s18
      %24 = dma.hbm_to_vmem [thread:$0]  %s0, 128, %s19, [#allocation4], 64, 64, 4
    $region5: #{tpu_custom_call.1} parent=1 // pred_fallthru
      _
    // Predicated region
    $region6: #{tpu_custom_call.1} parent=1 // pred_check
      _
    $region7: #{tpu_custom_call.1} parent=1 // pred_check_branch
      %26 = sbr.rel (0) target = $region9
    $region8: #{tpu_custom_call.1} parent=1 // pred_region
      %s28 = ssub.s32 2048, 2048
      %29 = vsyncadd [#allocation7], %s28
      %s30 = sshll.u32 [#allocation6], 4
      %s31 = int_to_ptr.vmem [resolvable:$true] %s30
      %36 = dma.hbm_to_vmem [thread:$0]  %s1, 2048, %s31, [#allocation7], 128, 128, 8
    $region9: #{tpu_custom_call.1} parent=1 // pred_fallthru
      _
    // Predicated region
    $region10: #{tpu_custom_call.1} parent=1 // pred_check
      _
    $region11: #{tpu_custom_call.1} parent=1 // pred_check_branch
      %38 = sbr.rel (0) target = $region13
    $region12: #{tpu_custom_call.1} parent=1 // pred_region
      _
    $region13: #{tpu_custom_call.1} parent=1 // pred_fallthru
      _
    // Predicated region
    $region14: #{tpu_custom_call.1} parent=1 // pred_check
      _
    $region15: #{tpu_custom_call.1} parent=1 // pred_check_branch
      %40 = sbr.rel (0) target = $region17
    $region16: #{tpu_custom_call.1} parent=1 // pred_region
      %s42 = ssub.s32 1024, 1024
      %43 = vsyncadd [#allocation7], %s42
      %s44 = sshll.u32 [#allocation8], 4
      %s45 = int_to_ptr.vmem [resolvable:$true] %s44
      %50 = dma.hbm_to_vmem [thread:$0]  %s3, 1024, %s45, [#allocation7], 64, 64, 4
    $region17: #{tpu_custom_call.1} parent=1 // pred_fallthru
      _
    // Predicated region
    $region18: #{tpu_custom_call.1} parent=1 // pred_check
      _
    $region19: #{tpu_custom_call.1} parent=1 // pred_check_branch
      %52 = sbr.rel (0) target = $region21
    $region20: #{tpu_custom_call.1} parent=1 // pred_region
      _
    $region21: #{tpu_custom_call.1} parent=1 // pred_fallthru
      _
    // Predicated region
    $region22: #{tpu_custom_call.1} parent=1 // pred_check
      _
    $region23: #{tpu_custom_call.1} parent=1 // pred_check_branch
      %54 = sbr.rel (0) target = $region25
    $region24: #{tpu_custom_call.1} parent=1 // pred_region
      %55 = dma.done [#allocation4], 128
    $region25: #{tpu_custom_call.1} parent=1 // pred_fallthru
      _
    // Predicated region
    $region26: #{tpu_custom_call.1} parent=1 // pred_check
      _
    $region27: #{tpu_custom_call.1} parent=1 // pred_check_branch
      %57 = sbr.rel (0) target = $region29
    $region28: #{tpu_custom_call.1} parent=1 // pred_region
      %58 = dma.done [#allocation7], 2048
    $region29: #{tpu_custom_call.1} parent=1 // pred_fallthru
      _
    // Predicated region
    $region30: #{tpu_custom_call.1} parent=1 // pred_check
      _
    $region31: #{tpu_custom_call.1} parent=1 // pred_check_branch
      %60 = sbr.rel (0) target = $region33
    $region32: #{tpu_custom_call.1} parent=1 // pred_region
      %61 = dma.done [#allocation7], 1024
    $region33: #{tpu_custom_call.1} parent=1 // pred_fallthru
      _
    %p63 = scmp.eq.s32.totalorder 0, 0
    // Predicated region
    $region34: #{tpu_custom_call.1} parent=1 // pred_check
      %p64 = pneg %p63
    $region35: #{tpu_custom_call.1} parent=1 // pred_check_branch
      %66 = sbr.rel (%p64) target = $region37
    $region36: #{tpu_custom_call.1} parent=1 // pred_region
      %67 = vst [vmem:[#allocation2] sm:$0xff] 0.0
      %68 = vst [vmem:[#allocation2 + $0x8] sm:$0xff] 0.0
    $region37: #{tpu_custom_call.1} parent=1 // pred_fallthru
      _
    %v69 = vld [vmem:[#allocation3] sm:$0xf]
    %v70 = vld [vmem:[#allocation3 + $0x4] sm:$0xf]
    %v71 = vld [vmem:[#allocation6] sm:$0xff]
    %v72 = vld [vmem:[#allocation6 + $0x8] sm:$0xff]
    %v73 = vld [vmem:[#allocation6 + $0x10] sm:$0xff]
    %v74 = vld [vmem:[#allocation6 + $0x18] sm:$0xff]
    %v75 = vld [vmem:[#allocation6 + $0x20] sm:$0xff]
    %v76 = vld [vmem:[#allocation6 + $0x28] sm:$0xff]
    %v77 = vld [vmem:[#allocation6 + $0x30] sm:$0xff]
    %v78 = vld [vmem:[#allocation6 + $0x38] sm:$0xff]
    %v79 = vld [vmem:[#allocation6 + $0x40] sm:$0xff]
    %v80 = vld [vmem:[#allocation6 + $0x48] sm:$0xff]
    %v81 = vld [vmem:[#allocation6 + $0x50] sm:$0xff]
    %v82 = vld [vmem:[#allocation6 + $0x58] sm:$0xff]
    %v83 = vld [vmem:[#allocation6 + $0x60] sm:$0xff]
    %v84 = vld [vmem:[#allocation6 + $0x68] sm:$0xff]
    %v85 = vld [vmem:[#allocation6 + $0x70] sm:$0xff]
    %v86 = vld [vmem:[#allocation6 + $0x78] sm:$0xff]
    %v87 = vld [vmem:[%s2] sm:$0x3]
    %v89 = vlaneseq
    %v90 = vshrl.u32 %v89, 7
    %v91 = vsub.s32 0, %v90
    %v92 = vrot.slane %v87, %v91
    %v93 = vlaneseq
    %v94 = vshrl.u32 %v93, 7
    %v95 = vsub.s32 1, %v94
    %v96 = vrot.slane %v87, %v95
    %v101 = vunpack.c.l.b16 %v69
    %v102 = vunpack.c.l.b16 %v70
    %v103 = vpack.c.b16 %v102, %v101
    %v121 = vunpack.c.l.b16 %v71
    %v122 = vunpack.c.h.b16 %v71
    %v123 = vunpack.c.l.b16 %v72
    %v124 = vunpack.c.h.b16 %v72
    %v125 = vunpack.c.l.b16 %v73
    %v126 = vunpack.c.h.b16 %v73
    %v127 = vunpack.c.l.b16 %v74
    %v128 = vunpack.c.h.b16 %v74
    %v129 = vunpack.c.l.b16 %v75
    %v130 = vunpack.c.h.b16 %v75
    %v131 = vunpack.c.l.b16 %v76
    %v132 = vunpack.c.h.b16 %v76
    %v133 = vunpack.c.l.b16 %v77
    %v134 = vunpack.c.h.b16 %v77
    %v135 = vunpack.c.l.b16 %v78
    %v136 = vunpack.c.h.b16 %v78
    %v137 = vunpack.c.l.b16 %v79
    %v138 = vunpack.c.h.b16 %v79
    %v139 = vunpack.c.l.b16 %v80
    %v140 = vunpack.c.h.b16 %v80
    %v141 = vunpack.c.l.b16 %v81
    %v142 = vunpack.c.h.b16 %v81
    %v143 = vunpack.c.l.b16 %v82
    %v144 = vunpack.c.h.b16 %v82
    %v145 = vunpack.c.l.b16 %v83
    %v146 = vunpack.c.h.b16 %v83
    %v147 = vunpack.c.l.b16 %v84
    %v148 = vunpack.c.h.b16 %v84
    %v149 = vunpack.c.l.b16 %v85
    %v150 = vunpack.c.h.b16 %v85
    %v151 = vunpack.c.l.b16 %v86
    %v152 = vunpack.c.h.b16 %v86
    %v153 = vpack.c.b16 %v123, %v121
    %v154 = vpack.c.b16 %v124, %v122
    %v155 = vpack.c.b16 %v127, %v125
    %v156 = vpack.c.b16 %v128, %v126
    %v157 = vpack.c.b16 %v131, %v129
    %v158 = vpack.c.b16 %v132, %v130
    %v159 = vpack.c.b16 %v135, %v133
    %v160 = vpack.c.b16 %v136, %v134
    %v161 = vpack.c.b16 %v139, %v137
    %v162 = vpack.c.b16 %v140, %v138
    %v163 = vpack.c.b16 %v143, %v141
    %v164 = vpack.c.b16 %v144, %v142
    %v165 = vpack.c.b16 %v147, %v145
    %v166 = vpack.c.b16 %v148, %v146
    %v167 = vpack.c.b16 %v151, %v149
    %v168 = vpack.c.b16 %v152, %v150
    %185 = vmatprep.subr.bf16.mxu0 %v154
    %186 = vmatpush1.bf16.msra.mxu0 %v153
    %187 = vmatprep.subr.bf16.mxu0 %v156
    %188 = vmatpush1.bf16.msra.mxu0 %v155
    %189 = vmatprep.subr.bf16.mxu0 %v158
    %190 = vmatpush1.bf16.msra.mxu0 %v157
    %191 = vmatprep.subr.bf16.mxu0 %v160
    %192 = vmatpush1.bf16.msra.mxu0 %v159
    %193 = vmatprep.subr.bf16.mxu0 %v162
    %194 = vmatpush1.bf16.msra.mxu0 %v161
    %195 = vmatprep.subr.bf16.mxu0 %v164
    %196 = vmatpush1.bf16.msra.mxu0 %v163
    %197 = vmatprep.subr.bf16.mxu0 %v166
    %198 = vmatpush1.bf16.msra.mxu0 %v165
    %199 = vmatprep.subr.bf16.mxu0 %v168
    %200 = vmatpush1.bf16.msra.mxu0 %v167
    %201 = vmatprep.subr.bf16.mxu0 0
    %202 = vmatpush1.bf16.msra.mxu0 0
    %203 = vmatprep.subr.bf16.mxu0 0
    %204 = vmatpush1.bf16.msra.mxu0 0
    %205 = vmatprep.subr.bf16.mxu0 0
    %206 = vmatpush1.bf16.msra.mxu0 0
    %207 = vmatprep.subr.bf16.mxu0 0
    %208 = vmatpush1.bf16.msra.mxu0 0
    %209 = vmatprep.subr.bf16.mxu0 0
    %210 = vmatpush1.bf16.msra.mxu0 0
    %211 = vmatprep.subr.bf16.mxu0 0
    %212 = vmatpush1.bf16.msra.mxu0 0
    %213 = vmatprep.subr.bf16.mxu0 0
    %214 = vmatpush1.bf16.msra.mxu0 0
    %215 = vmatprep.subr.bf16.mxu0 0
    %216 = vmatpush1.bf16.msra.mxu0 0
    %217 = vmatprep.mubr.bf16.mxu0 0
    %218 = vmatmul.mubr.bf16.gmra.mrb[0].mxu0 %v103
    %v219 = vpop.f32.mrb[0].mxu0
    %v220 = vadd.f32 %v92, %v219
    %v221 = vpop.f32.mrb[0].mxu0
    %v222 = vadd.f32 %v96, %v221
    %v223 = vpop.f32.mrb[0].mxu0
    %v224 = vadd.f32 %v92, %v223
    %v225 = vpop.f32.mrb[0].mxu0
    %v226 = vadd.f32 %v96, %v225
    %227 = vdwg.mxu0
    %v228 = vsub.f32 0.0, %v220
    %v229 = vsub.f32 0.0, %v224
    %v230 = vmul.f32 %v228, 1.442695
    %v231 = vpow.pop %v230
    %v232 = vmul.f32 %v229, 1.442695
    %v233 = vpow.pop %v232
    %v234 = vadd.f32 %v231, 1.0
    %v235 = vadd.f32 %v233, 1.0
    %v236 = vrcp.pop %v234
    %v237 = vrcp.pop %v235
    %v238 = vmul.f32 %v220, %v236
    %v239 = vmul.f32 %v224, %v237
    %v240 = vmul.f32 %v238, %v222
    %v241 = vmul.f32 %v239, %v226
    %v242 = vpack.c.bf16 %v241, %v240
    %v243 = vld [vmem:[#allocation2] sm:$0xff]
    %v244 = vld [vmem:[#allocation2 + $0x8] sm:$0xff]
    %v245 = vld [vmem:[#allocation8] sm:$0xf]
    %v246 = vld [vmem:[#allocation8 + $0x4] sm:$0xf]
    %v247 = vld [vmem:[#allocation8 + $0x8] sm:$0xf]
    %v248 = vld [vmem:[#allocation8 + $0xc] sm:$0xf]
    %v249 = vld [vmem:[#allocation8 + $0x10] sm:$0xf]
    %v250 = vld [vmem:[#allocation8 + $0x14] sm:$0xf]
    %v251 = vld [vmem:[#allocation8 + $0x18] sm:$0xf]
    %v252 = vld [vmem:[#allocation8 + $0x1c] sm:$0xf]
    %v253 = vld [vmem:[#allocation8 + $0x20] sm:$0xf]
    %v254 = vld [vmem:[#allocation8 + $0x24] sm:$0xf]
    %v255 = vld [vmem:[#allocation8 + $0x28] sm:$0xf]
    %v256 = vld [vmem:[#allocation8 + $0x2c] sm:$0xf]
    %v257 = vld [vmem:[#allocation8 + $0x30] sm:$0xf]
    %v258 = vld [vmem:[#allocation8 + $0x34] sm:$0xf]
    %v259 = vld [vmem:[#allocation8 + $0x38] sm:$0xf]
    %v260 = vld [vmem:[#allocation8 + $0x3c] sm:$0xf]
    %v277 = vunpack.c.l.b16 %v245
    %v278 = vunpack.c.l.b16 %v246
    %v279 = vunpack.c.l.b16 %v247
    %v280 = vunpack.c.l.b16 %v248
    %v281 = vunpack.c.l.b16 %v249
    %v282 = vunpack.c.l.b16 %v250
    %v283 = vunpack.c.l.b16 %v251
    %v284 = vunpack.c.l.b16 %v252
    %v285 = vunpack.c.l.b16 %v253
    %v286 = vunpack.c.l.b16 %v254
    %v287 = vunpack.c.l.b16 %v255
    %v288 = vunpack.c.l.b16 %v256
    %v289 = vunpack.c.l.b16 %v257
    %v290 = vunpack.c.l.b16 %v258
    %v291 = vunpack.c.l.b16 %v259
    %v292 = vunpack.c.l.b16 %v260
    %v293 = vpack.c.b16 %v278, %v277
    %v294 = vpack.c.b16 %v280, %v279
    %v295 = vpack.c.b16 %v282, %v281
    %v296 = vpack.c.b16 %v284, %v283
    %v297 = vpack.c.b16 %v286, %v285
    %v298 = vpack.c.b16 %v288, %v287
    %v299 = vpack.c.b16 %v290, %v289
    %v300 = vpack.c.b16 %v292, %v291
    %309 = vmatprep.subr.bf16.mxu0 0
    %310 = vmatpush1.bf16.msra.mxu0 %v293
    %311 = vmatprep.subr.bf16.mxu0 0
    %312 = vmatpush1.bf16.msra.mxu0 %v294
    %313 = vmatprep.subr.bf16.mxu0 0
    %314 = vmatpush1.bf16.msra.mxu0 %v295
    %315 = vmatprep.subr.bf16.mxu0 0
    %316 = vmatpush1.bf16.msra.mxu0 %v296
    %317 = vmatprep.subr.bf16.mxu0 0
    %318 = vmatpush1.bf16.msra.mxu0 %v297
    %319 = vmatprep.subr.bf16.mxu0 0
    %320 = vmatpush1.bf16.msra.mxu0 %v298
    %321 = vmatprep.subr.bf16.mxu0 0
    %322 = vmatpush1.bf16.msra.mxu0 %v299
    %323 = vmatprep.subr.bf16.mxu0 0
    %324 = vmatpush1.bf16.msra.mxu0 %v300
    %325 = vmatprep.subr.bf16.mxu0 0
    %326 = vmatpush1.bf16.msra.mxu0 0
    %327 = vmatprep.subr.bf16.mxu0 0
    %328 = vmatpush1.bf16.msra.mxu0 0
    %329 = vmatprep.subr.bf16.mxu0 0
    %330 = vmatpush1.bf16.msra.mxu0 0
    %331 = vmatprep.subr.bf16.mxu0 0
    %332 = vmatpush1.bf16.msra.mxu0 0
    %333 = vmatprep.subr.bf16.mxu0 0
    %334 = vmatpush1.bf16.msra.mxu0 0
    %335 = vmatprep.subr.bf16.mxu0 0
    %336 = vmatpush1.bf16.msra.mxu0 0
    %337 = vmatprep.subr.bf16.mxu0 0
    %338 = vmatpush1.bf16.msra.mxu0 0
    %339 = vmatprep.subr.bf16.mxu0 0
    %340 = vmatpush1.bf16.msra.mxu0 0
    %341 = vmatprep.mubr.bf16.mxu0 0
    %342 = vmatmul.mubr.bf16.gmra.mrb[0].mxu0 %v242
    %v343 = vpop.f32.mrb[0].mxu0
    %v344 = vadd.f32 0.0, %v343
    %v345 = vpop.f32.mrb[0].mxu0
    %v346 = vpop.f32.mrb[0].mxu0
    %v347 = vadd.f32 0.0, %v346
    %v348 = vpop.f32.mrb[0].mxu0
    %349 = vdwg.mxu0
    %v350 = vadd.f32 %v243, %v344
    %v351 = vadd.f32 %v244, %v347
    %352 = vst [vmem:[#allocation2] sm:$0xff] %v350
    %353 = vst [vmem:[#allocation2 + $0x8] sm:$0xff] %v351
    // Predicated region
    $region38: #{tpu_custom_call.1} parent=1 // pred_check
      %p354 = pneg %p63
    $region39: #{tpu_custom_call.1} parent=1 // pred_check_branch
      %356 = sbr.rel (%p354) target = $region41
    $region40: #{tpu_custom_call.1} parent=1 // pred_region
      %v357 = vld [vmem:[#allocation2] sm:$0xff]
      %v358 = vld [vmem:[#allocation2 + $0x8] sm:$0xff]
      %v359 = vld [vmem:[%s4] sm:$0x1]
      %v361 = vlaneseq
      %v362 = vshrl.u32 %v361, 7
      %v363 = vsub.s32 0, %v362
      %v364 = vrot.slane %v359, %v363
      %v366 = vadd.f32 %v357, %v364
      %v367 = vadd.f32 %v358, %v364
      %368 = vst [vmem:[#allocation9] sm:$0xff] %v366
      %369 = vst [vmem:[#allocation9 + $0x8] sm:$0xff] %v367
    $region41: #{tpu_custom_call.1} parent=1 // pred_fallthru
      _
    // Predicated region
    $region42: #{tpu_custom_call.1} parent=1 // pred_check
      _
    $region43: #{tpu_custom_call.1} parent=1 // pred_check_branch
      %371 = sbr.rel (0) target = $region45
    $region44: #{tpu_custom_call.1} parent=1 // pred_region
      %s373 = ssub.s32 256, 256
      %374 = vsyncadd [#allocation5], %s373
      %s375 = sshll.u32 [#allocation9], 4
      %s376 = int_to_ptr.vmem [resolvable:$true] %s375
      %381 = dma.vmem_to_hbm [thread:$0]  %s376, 256, %s5, [#allocation5], 128, 128, 8
    $region45: #{tpu_custom_call.1} parent=1 // pred_fallthru
      _
    // Predicated region
    $region46: #{tpu_custom_call.1} parent=1 // pred_check
      _
    $region47: #{tpu_custom_call.1} parent=1 // pred_check_branch
      %383 = sbr.rel (0) target = $region49
    $region48: #{tpu_custom_call.1} parent=1 // pred_region
      %384 = dma.done [#allocation5], 256
    $region49: #{tpu_custom_call.1} parent=1 // pred_fallthru
      _
    %385 = vsyncpa [#allocation4], 1
    %386 = vsyncpa [#allocation7], 1
    %387 = vsyncpa [#allocation5], 1

</llo_original>
